<compile_context>
chip_gen: v7x
topology: tpu7x:2x2x1
jax: 0.10.0
libtpu: 0.0.40
codegen_flags: <defaults>
</compile_context>

<pallas_src>
import functools

import jax
import jax.numpy as jnp
from jax.experimental import pallas as pl
from jax.experimental.pallas import tpu as pltpu

# Covers sublane tiling for f32 (8), bf16 (16), int8/fp8 (32).
_SUBLANE_MULTIPLE = 32


def _recurrent_block_kernel(eps_ref, delta_ref, x_ref, o_ref):
    eps = eps_ref[0]        # scalar from SMEM
    delta = delta_ref[0]    # scalar from SMEM
    x = x_ref[...].astype(jnp.float32)
    y = jnp.floor(x * eps)
    # dist[dist > delta] = delta  <=>  elementwise min(y, delta)
    o_ref[...] = jnp.minimum(y, delta).astype(o_ref.dtype)


def _round_up(x, m):
    return ((x + m - 1) // m) * m


@functools.partial(jax.jit, static_argnames=("target_block_bytes", "donate_input"))
def recurrent_block_forward(dist, eps, delta, *, target_block_bytes=4 << 20,
                            donate_input=False):
    """Pallas implementation of ReccurrentBlock.forward.

    dist: float array of any shape (kept in its native floating dtype).
    eps, delta: the module's two scalar learnable parameters.
    """
    dist = jnp.asarray(dist)
    if not jnp.issubdtype(dist.dtype, jnp.floating):
        dist = dist.astype(jnp.float32)
    orig_shape = dist.shape
    total = dist.size
    if total == 0:
        return dist

    # 2-D view without any padding or extra HBM pass.
    x2d = None
    for lanes in (1024, 512, 256, 128):          # widest lane-dense view that fits
        if total % lanes == 0:
            x2d = dist.reshape(total // lanes, lanes)
            break
    if x2d is None:
        # Ragged fallback: full-extent last dim (Pallas masks the edge tile).
        if dist.ndim >= 2:
            x2d = dist.reshape(-1, orig_shape[-1])
        else:
            x2d = dist.reshape(1, total)

    M, N = x2d.shape
    itemsize = jnp.dtype(x2d.dtype).itemsize

    # Multi-MiB block to amortize per-grid-step overhead (capped at 8 MiB so
    # double-buffered in+out stays well under v7x's 64 MiB VMEM).
    blk_target = min(int(target_block_bytes), 8 << 20)
    tm = max(blk_target // max(N * itemsize, 1), _SUBLANE_MULTIPLE)
    tm = _round_up(tm, _SUBLANE_MULTIPLE)
    if tm >= M:
        tm = M
        # If the whole array fits one block, split into >=2 grid steps so the
        # "parallel" axis can shard across v7x's two TensorCores (costs one
        # extra ~0.35 us step on single-TC chips -- negligible).
        if M >= 2 * _SUBLANE_MULTIPLE:
            tm = _round_up(pl.cdiv(M, 2), _SUBLANE_MULTIPLE)
    grid = (pl.cdiv(M, tm),)

    block_bytes = tm * N * itemsize
    try:
        vmem_cap = pltpu.get_tpu_info().vmem_capacity_bytes
    except Exception:
        vmem_cap = 128 << 20
    # in + out, double-buffered, + 2 MiB headroom; never above half of VMEM.
    vmem_limit = min(max(4 * block_bytes + (2 << 20), 4 << 20), vmem_cap // 2)

    eps_arr = jnp.asarray(eps, jnp.float32).reshape((1,))
    delta_arr = jnp.asarray(delta, jnp.float32).reshape((1,))

    extra_kwargs = {}
    if donate_input:
        extra_kwargs["input_output_aliases"] = {2: 0}

    out2d = pl.pallas_call(
        _recurrent_block_kernel,
        out_shape=jax.ShapeDtypeStruct((M, N), x2d.dtype),
        grid=grid,
        in_specs=[
            pl.BlockSpec(memory_space=pltpu.MemorySpace.SMEM),   # eps
            pl.BlockSpec(memory_space=pltpu.MemorySpace.SMEM),   # delta
            pl.BlockSpec((tm, N), lambda i: (i, 0)),             # dist tile
        ],
        out_specs=pl.BlockSpec((tm, N), lambda i: (i, 0)),
        compiler_params=pltpu.CompilerParams(
            dimension_semantics=("parallel",),
            vmem_limit_bytes=int(vmem_limit),
        ),
        cost_estimate=pl.CostEstimate(
            flops=3 * M * N,
            transcendentals=0,
            bytes_accessed=2 * M * N * itemsize,
        ),
        **extra_kwargs,
    )(eps_arr, delta_arr, x2d)

    return out2d.reshape(orig_shape)


def recurrent_block_reference(dist, eps, delta):
    x = jnp.asarray(dist)
    if not jnp.issubdtype(x.dtype, jnp.floating):
        x = x.astype(jnp.float32)
    y = jnp.floor(x.astype(jnp.float32) * jnp.float32(eps))
    y = jnp.minimum(y, jnp.float32(delta))
    return y.astype(x.dtype)


if __name__ == "__main__":
    key = jax.random.PRNGKey(0)
    k1, k2, k3 = jax.random.split(key, 3)

    # Module default init: eps = 10.0, delta = 10.0 (learnable scalar params).
    eps, delta = 10.0, 10.0

    # Case 1: f32, flat size multiple of 128 -> lane-dense fast path.
    dist = jax.random.uniform(k1, (2, 16, 16), jnp.float32, minval=0.0, maxval=3.0)
    out = jax.block_until_ready(recurrent_block_forward(dist, eps, delta))
    ref = recurrent_block_reference(dist, eps, delta)
    assert out.shape == dist.shape and out.dtype == dist.dtype
    assert jnp.allclose(out, ref), "mismatch vs reference (aligned f32)"

    # Case 2: bf16, unaligned flat size -> ragged full-extent-last-dim path,
    # multi-step grid with masked edge tile, native-dtype HBM I/O.
    dist2 = (jax.random.normal(k2, (4, 33, 130), jnp.float32) * 2.0).astype(jnp.bfloat16)
    out2 = jax.block_until_ready(recurrent_block_forward(dist2, eps, delta))
    ref2 = recurrent_block_reference(dist2, eps, delta)
    assert out2.shape == dist2.shape and out2.dtype == dist2.dtype
    assert jnp.allclose(out2.astype(jnp.float32), ref2.astype(jnp.float32)), \
        "mismatch vs reference (bf16 ragged)"

    # Case 3: 1-D odd length -> single-block fallback path.
    dist3 = jax.random.normal(k3, (1000,), jnp.float32)
    out3 = jax.block_until_ready(recurrent_block_forward(dist3, eps, delta))
    ref3 = recurrent_block_reference(dist3, eps, delta)
    assert out3.shape == dist3.shape
    assert jnp.allclose(out3, ref3), "mismatch vs reference (1-D odd length)"

    print("KERNEL_OK")
</pallas_src>

<mosaic_0001>
module attributes {stable_mosaic.version = 11 : i64} {
  func.func @_recurrent_block_kernel(%arg0: i32, %arg1: memref<1xf32, #tpu.memory_space<smem>>, %arg2: memref<1xf32, #tpu.memory_space<smem>>, %arg3: memref<1x512xf32, #tpu.memory_space<vmem>>, %arg4: memref<1x512xf32, #tpu.memory_space<vmem>>) attributes {dimension_semantics = [#tpu.dimension_semantics<parallel>], iteration_bounds = array<i64: 1>, scalar_prefetch = 0 : i64, scratch_operands = 0 : i64, tpu.core_type = #tpu.core_type<tc>, window_params = [{transform_indices = @transform_0, window_bounds = array<i64: 1>}, {transform_indices = @transform_1, window_bounds = array<i64: 1>}, {transform_indices = @transform_2, window_bounds = array<i64: 1, 512>}, {transform_indices = @transform_3, window_bounds = array<i64: 1, 512>}]} {
    %c0 = arith.constant 0 : index
    %0 = memref.load %arg1[%c0] : memref<1xf32, #tpu.memory_space<smem>>
    %c0_0 = arith.constant 0 : index
    %1 = memref.load %arg2[%c0_0] : memref<1xf32, #tpu.memory_space<smem>>
    %c0_1 = arith.constant 0 : index
    %c0_2 = arith.constant 0 : index
    %2 = vector.load %arg3[%c0_1, %c0_2] : memref<1x512xf32, #tpu.memory_space<vmem>>, vector<1x512xf32>
    %3 = vector.broadcast %0 : f32 to vector<1x512xf32>
    %4 = arith.mulf %2, %3 : vector<1x512xf32>
    %5 = math.floor %4 : vector<1x512xf32>
    %6 = vector.broadcast %1 : f32 to vector<1x512xf32>
    %7 = arith.minimumf %5, %6 : vector<1x512xf32>
    %c0_3 = arith.constant 0 : index
    %c0_4 = arith.constant 0 : index
    %8 = vector.load %arg4[%c0_3, %c0_4] : memref<1x512xf32, #tpu.memory_space<vmem>>, vector<1x512xf32>
    tpu.vector_store %arg4[%c0_3, %c0_4], %7 {strides = array<i32>} : memref<1x512xf32, #tpu.memory_space<vmem>>, vector<1x512xf32>,
    return
  }
  func.func @transform_0(%arg0: i32) -> i32 {
    %c0_i32 = arith.constant 0 : i32
    %c0_i32_0 = arith.constant 0 : i32
    return %c0_i32 : i32
  }
  func.func @transform_1(%arg0: i32) -> i32 {
    %c0_i32 = arith.constant 0 : i32
    %c0_i32_0 = arith.constant 0 : i32
    return %c0_i32 : i32
  }
  func.func @transform_2(%arg0: i32) -> (i32, i32) {
    %c0_i32 = arith.constant 0 : i32
    %c0_i32_0 = arith.constant 0 : i32
    return %arg0, %c0_i32 : i32, i32
  }
  func.func @transform_3(%arg0: i32) -> (i32, i32) {
    %c0_i32 = arith.constant 0 : i32
    %c0_i32_0 = arith.constant 0 : i32
    return %arg0, %c0_i32 : i32, i32
  }
}

</mosaic_0001>

<llo_original>
// kernel: recurrent_block_forward.1
$region0: #{recurrent_block_forward.1}
  #allocation0 [shape = 'u32[]', space=smem, size = 0x4, offset = 0x4, fixed_abs, tag = 'smem constant byte address 0x4 - core index']
  #allocation1 [shape = 'u32[144,128]{1,0:T(1,128)}', space=vmem, size = 0x12000, scoped, tag = 'internal scratch']
  #allocation2 [shape = 'f32[1]{0:T(128)S(6)}', space=smem, size = 0x200, scoped, tag = 'scoped memory for recurrent_block_forward.1']
  #allocation3 [shape = 'f32[1]{0:T(128)S(6)}', space=smem, size = 0x200, scoped, tag = 'scoped memory for recurrent_block_forward.1']
  %s0 = inlined_call_operand.<no memory space> [shape: f32[1], index: 0, kind: input, shape index: {}]
  %s1 = inlined_call_operand.<no memory space> [shape: f32[1], index: 1, kind: input, shape index: {}]
  %s2 = inlined_call_operand.vmem [shape: f32[1,512], index: 2, kind: input, shape index: {}]
  %s3 = inlined_call_operand.vmem [shape: f32[1,512], index: 3, kind: output, shape index: {}]
  %s4 = sld [smem:[#allocation0]]
  $region22: #{recurrent_block_forward.1} parent=0
    _
  %s6 = ssub.s32 1, %s4
  %s7 = scalar_select 0, %s6, %s4
  %8 = sst [smem:[#allocation2]] %s0
  %9 = sst [smem:[#allocation3]] %s1
  // Predicated region
  $region2: #{recurrent_block_forward.1} parent=0 // pred_check
    _
  $region3: #{recurrent_block_forward.1} parent=0 // pred_check_branch
    %11 = sbr.rel (0) target = $region5
  $region4: #{recurrent_block_forward.1} parent=0 // pred_region
    _
  $region5: #{recurrent_block_forward.1} parent=0 // pred_fallthru
    _
  // Predicated region
  $region6: #{recurrent_block_forward.1} parent=0 // pred_check
    _
  $region7: #{recurrent_block_forward.1} parent=0 // pred_check_branch
    %13 = sbr.rel (0) target = $region9
  $region8: #{recurrent_block_forward.1} parent=0 // pred_region
    _
  $region9: #{recurrent_block_forward.1} parent=0 // pred_fallthru
    _
  // Predicated region
  $region10: #{recurrent_block_forward.1} parent=0 // pred_check
    _
  $region11: #{recurrent_block_forward.1} parent=0 // pred_check_branch
    %15 = sbr.rel (0) target = $region13
  $region12: #{recurrent_block_forward.1} parent=0 // pred_region
    _
  $region13: #{recurrent_block_forward.1} parent=0 // pred_fallthru
    _
  %s16 = sld [smem:[#allocation2]]
  %s17 = sld [smem:[#allocation3]]
  %v18 = vld [vmem:[%s2] sm:$0xf]
  %v19 = vstv %s16
  %v20 = vmul.f32 %v18, %v19
  %v21 = vfloor.f32 %v20
  %v22 = vstv %s17
  %v23 = vmin.f32 %v21, %v22
  %v24 = vlaneseq
  %vm25 = vcmp.ge.s32.totalorder %v24, 0
  %vm26 = vcmp.lt.s32.totalorder %v24, 512
  %vm27 = vmand %vm25, %vm26
  %28 = vst.msk [vmem:[%s3] sm:$0xf] %vm27, %v23
  // Predicated region
  $region14: #{recurrent_block_forward.1} parent=0 // pred_check
    _
  $region15: #{recurrent_block_forward.1} parent=0 // pred_check_branch
    %30 = sbr.rel (0) target = $region17
  $region16: #{recurrent_block_forward.1} parent=0 // pred_region
    _
  $region17: #{recurrent_block_forward.1} parent=0 // pred_fallthru
    _
  // Predicated region
  $region18: #{recurrent_block_forward.1} parent=0 // pred_check
    _
  $region19: #{recurrent_block_forward.1} parent=0 // pred_check_branch
    %32 = sbr.rel (0) target = $region21
  $region20: #{recurrent_block_forward.1} parent=0 // pred_region
    _
  $region21: #{recurrent_block_forward.1} parent=0 // pred_fallthru
    _

</llo_original>
